<compile_context>
chip_gen: v5e
topology: v5e:2x2
jax: 0.10.0
libtpu: 0.0.40
codegen_flags: <defaults>
</compile_context>

<pallas_src>
import jax
import jax.numpy as jnp
from jax.experimental import pallas as pl
from jax.experimental.pallas import tpu as pltpu


_GELU_C0 = 0.7978845608028654
_GELU_C1 = 0.044715


def _round_up(x, m):
    return ((x + m - 1) // m) * m


def _pick_tn(h4, requested):
    """Tile size for the 4H axis.

    Returns (tn, h4_padded).  Prefers the largest multiple of 128 that divides
    h4 and is <= requested.  If only tiny divisors exist, pads h4 up to a
    multiple of the requested tile instead (zero-padded W1 columns / b1 entries
    / W2 rows contribute exactly zero to the output).
    """
    requested = max(128, (requested // 128) * 128)
    if h4 <= requested:
        t = _round_up(h4, 128)
        return t, t
    best = 0
    t = 128
    while t <= requested:
        if h4 % t == 0:
            best = t
        t += 128
    if best >= min(512, requested):
        return best, h4
    return requested, _round_up(h4, requested)


def _gelu_f32(h):
    # OpenAI tanh-gelu, computed in f32 (EUP tanh, VPU polynomial).
    return 0.5 * h * (1.0 + jnp.tanh(_GELU_C0 * h * (1.0 + _GELU_C1 * h * h)))


def _mlp_kernel_scratch(x_ref, w1_ref, b1_ref, w2_ref, b2_ref, o_ref, acc_ref):
    # Non-f32 output: accumulate into an f32 VMEM scratch resident across k.
    k = pl.program_id(1)

    @pl.when(k == 0)
    def _():
        acc_ref[...] = jnp.zeros_like(acc_ref)

    h = jnp.dot(x_ref[...], w1_ref[...], preferred_element_type=jnp.float32)
    g = _gelu_f32(h + b1_ref[...])
    acc_ref[...] += jnp.dot(g.astype(w2_ref.dtype), w2_ref[...],
                            preferred_element_type=jnp.float32)

    @pl.when(k == pl.num_programs(1) - 1)
    def _():
        o_ref[...] = (acc_ref[...] + b2_ref[...]).astype(o_ref.dtype)


def _mlp_kernel_inplace(x_ref, w1_ref, b1_ref, w2_ref, b2_ref, o_ref):
    # f32 output: accumulate directly into the resident output tile (no scratch).
    k = pl.program_id(1)

    @pl.when(k == 0)
    def _():
        o_ref[...] = jnp.zeros_like(o_ref)

    h = jnp.dot(x_ref[...], w1_ref[...], preferred_element_type=jnp.float32)
    g = _gelu_f32(h + b1_ref[...])
    o_ref[...] += jnp.dot(g.astype(w2_ref.dtype), w2_ref[...],
                          preferred_element_type=jnp.float32)

    @pl.when(k == pl.num_programs(1) - 1)
    def _():
        o_ref[...] = o_ref[...] + b2_ref[...]


def gpt2_parallel_mlp(hidden_states, w1, b1, w2, b2, *, tm=None, tn=1280,
                      compute_dtype=jnp.bfloat16):
    """Fused GPT2 MLP forward.

    hidden_states: [B, S, H]; w1: [H, 4H]; b1: [4H]; w2: [4H, H]; b2: [H].
    compute_dtype: matmul-operand dtype (default bf16; pass None to keep the
                   input/weight dtype).  Accumulation and gelu are f32; the
                   output keeps the input dtype.
    """
    B, S, H = hidden_states.shape
    H4 = w1.shape[1]
    out_dtype = hidden_states.dtype

    if compute_dtype is not None:
        if hidden_states.dtype != compute_dtype:
            hidden_states = hidden_states.astype(compute_dtype)
        w1 = w1.astype(compute_dtype)
        w2 = w2.astype(compute_dtype)
    # Biases stay f32: they are added to f32 pre-gelu / accumulator values.
    b1_f32 = b1.astype(jnp.float32)
    b2_2d = b2.astype(jnp.float32).reshape(1, H)

    # Generation-aware VMEM budget (v5e/v6e: 128 MiB, v7x: 64 MiB per core).
    try:
        vmem_cap = int(pltpu.get_tpu_info().vmem_capacity_bytes)
    except Exception:
        vmem_cap = 64 << 20
    vmem_budget = int(0.85 * vmem_cap)      # headroom for Mosaic internal scratch

    # 4H tile (pads the 4H axis only when no decent 128-multiple divisor exists).
    tn_eff, H4_pad = _pick_tn(H4, tn)
    if H4_pad != H4:
        w1 = jnp.pad(w1, ((0, 0), (0, H4_pad - H4)))
        w2 = jnp.pad(w2, ((0, H4_pad - H4), (0, 0)))
        b1_f32 = jnp.pad(b1_f32, (0, H4_pad - H4))
    b1_2d = b1_f32.reshape(1, H4_pad)

    # Row tile: big enough to be MXU-bound on weight streaming.
    M = B * S
    if tm is None:
        tm = 1024 if vmem_cap >= (96 << 20) else 512
    tm = _round_up(max(tm, 8), 8)
    tm_eff = min(tm, _round_up(M, 8))
    # Keep >=2 row-grid steps when M is large enough so the "parallel" axis can
    # shard across v7x's two TensorCores.
    if tm_eff >= M and M >= 512:
        tm_eff = _round_up((M + 1) // 2, 128)

    use_scratch = jnp.dtype(out_dtype) != jnp.dtype(jnp.float32)

    act_bytes = jnp.dtype(hidden_states.dtype).itemsize
    w_bytes = jnp.dtype(w1.dtype).itemsize
    out_bytes = jnp.dtype(out_dtype).itemsize

    def _vmem_bytes(tm_, tn_):
        est = (2 * tm_ * H * act_bytes       # x tile (double-buffered)
               + 2 * H * tn_ * w_bytes       # W1 column block
               + 2 * tn_ * H * w_bytes       # W2 row block
               + 2 * 8 * (tn_ + H) * 4       # biases (sublane-padded)
               + 2 * tm_ * H * out_bytes     # output tile
               + 4 * tm_ * tn_ * 4)          # f32 gelu temporaries (headroom)
        if use_scratch:
            est += tm_ * H * 4               # f32 accumulator scratch
        return est

    # Shrink the row tile if the footprint would not fit the per-core budget.
    while _vmem_bytes(tm_eff, tn_eff) > vmem_budget and tm_eff > 256:
        tm_eff = max(256, _round_up(tm_eff // 2, 8))

    M_pad = _round_up(M, tm_eff)
    x2d = hidden_states.reshape(M, H)
    if M_pad != M:
        x2d = jnp.pad(x2d, ((0, M_pad - M), (0, 0)))

    vmem_limit = int(min(max(int(1.5 * _vmem_bytes(tm_eff, tn_eff)), 32 << 20),
                         vmem_budget))

    kernel = _mlp_kernel_scratch if use_scratch else _mlp_kernel_inplace
    scratch = [pltpu.VMEM((tm_eff, H), jnp.float32)] if use_scratch else []

    out2d = pl.pallas_call(
        kernel,
        out_shape=jax.ShapeDtypeStruct((M_pad, H), out_dtype),
        grid_spec=pltpu.PrefetchScalarGridSpec(
            num_scalar_prefetch=0,
            grid=(M_pad // tm_eff, H4_pad // tn_eff),   # (row tiles, 4H tiles)
            in_specs=[
                pl.BlockSpec((tm_eff, H), lambda i, k: (i, 0)),   # x tile (resident over k)
                pl.BlockSpec((H, tn_eff), lambda i, k: (0, k)),   # W1 column block
                pl.BlockSpec((1, tn_eff), lambda i, k: (0, k)),   # b1 block
                pl.BlockSpec((tn_eff, H), lambda i, k: (k, 0)),   # W2 row block
                pl.BlockSpec((1, H), lambda i, k: (0, 0)),        # b2
            ],
            out_specs=pl.BlockSpec((tm_eff, H), lambda i, k: (i, 0)),
            scratch_shapes=scratch,
        ),
        compiler_params=pltpu.CompilerParams(
            dimension_semantics=("parallel", "arbitrary"),
            vmem_limit_bytes=vmem_limit,
        ),
    )(x2d, w1, b1_2d, w2, b2_2d)

    if M_pad != M:
        out2d = out2d[:M]
    # TODO(synk): output dropout (p=output_dropout_prob) omitted — identity in
    # eval mode; training-mode dropout would use pltpu.prng_seed/prng_random_bits.
    return out2d.reshape(B, S, H)


def init_params(key, hidden_size, dtype=jnp.float32):
    """Init mirroring the module: normal(0, 0.02) weights, zero biases."""
    h4 = 4 * hidden_size
    k1, k2 = jax.random.split(key)
    # torch ColumnParallelLinear weight is (4h, h); we store its transpose (h, 4h).
    w1 = (0.02 * jax.random.normal(k1, (hidden_size, h4))).astype(dtype)
    b1 = jnp.zeros((h4,), dtype)
    # torch RowParallelLinear weight is (h, 4h); we store its transpose (4h, h).
    w2 = (0.02 * jax.random.normal(k2, (h4, hidden_size))).astype(dtype)
    b2 = jnp.zeros((hidden_size,), dtype)
    return w1, b1, w2, b2


if __name__ == "__main__":
    B, S, H = 2, 8, 32  # batch, seq, hidden -> 4H = 128
    key = jax.random.PRNGKey(0)
    kx, kp, kb1, kb2 = jax.random.split(key, 4)
    x = jax.random.normal(kx, (B, S, H), jnp.float32)
    w1, b1, w2, b2 = init_params(kp, H)
    # Non-zero biases so the bias-add paths are exercised.
    b1 = 0.1 * jax.random.normal(kb1, (4 * H,), jnp.float32)
    b2 = 0.1 * jax.random.normal(kb2, (H,), jnp.float32)

    # Pure-JAX reference.
    h_ref = x.reshape(-1, H) @ w1 + b1
    g_ref = 0.5 * h_ref * (1.0 + jnp.tanh(
        0.7978845608028654 * h_ref * (1.0 + 0.044715 * h_ref * h_ref)))
    ref = (g_ref @ w2 + b2).reshape(B, S, H)

    # Default (production) path: bf16 operands, f32 accumulation, f32 output.
    out_bf16 = gpt2_parallel_mlp(x, w1, b1, w2, b2)
    jax.block_until_ready(out_bf16)
    assert out_bf16.dtype == x.dtype
    assert jnp.allclose(out_bf16, ref, atol=5e-2, rtol=5e-2), "bf16 mismatch vs reference"

    # Full-f32 path (strict numerics, exercises the in-place accumulator kernel).
    out_f32 = gpt2_parallel_mlp(x, w1, b1, w2, b2, compute_dtype=None)
    jax.block_until_ready(out_f32)
    assert jnp.allclose(out_f32, ref, atol=1e-5, rtol=1e-5), "f32 mismatch vs reference"

    # bf16 input/output (exercises the f32-scratch accumulator kernel).
    out_b = gpt2_parallel_mlp(x.astype(jnp.bfloat16), w1, b1, w2, b2)
    jax.block_until_ready(out_b)
    assert out_b.dtype == jnp.bfloat16
    assert jnp.allclose(out_b.astype(jnp.float32), ref, atol=5e-2, rtol=5e-2), \
        "bf16-io mismatch vs reference"

    print("KERNEL_OK")
</pallas_src>

<mosaic_0001>
module attributes {stable_mosaic.version = 11 : i64} {
  func.func @_mlp_kernel_inplace(%arg0: i32, %arg1: i32, %arg2: memref<16x32xbf16, #tpu.memory_space<vmem>>, %arg3: memref<32x128xbf16, #tpu.memory_space<vmem>>, %arg4: memref<1x128xf32, #tpu.memory_space<vmem>>, %arg5: memref<128x32xbf16, #tpu.memory_space<vmem>>, %arg6: memref<1x32xf32, #tpu.memory_space<vmem>>, %arg7: memref<16x32xf32, #tpu.memory_space<vmem>>) attributes {dimension_semantics = [#tpu.dimension_semantics<parallel>, #tpu.dimension_semantics<arbitrary>], iteration_bounds = array<i64: 1, 1>, scalar_prefetch = 0 : i64, scratch_operands = 0 : i64, tpu.core_type = #tpu.core_type<tc>, window_params = [{transform_indices = @transform_0, window_bounds = array<i64: 16, 32>}, {transform_indices = @transform_1, window_bounds = array<i64: 32, 128>}, {transform_indices = @transform_2, window_bounds = array<i64: 1, 128>}, {transform_indices = @transform_3, window_bounds = array<i64: 128, 32>}, {pipeline_mode = #tpu.pipeline_mode<synchronous>, transform_indices = @transform_4, window_bounds = array<i64: 1, 32>}, {transform_indices = @transform_5, window_bounds = array<i64: 16, 32>}]} {
    %c0_i32 = arith.constant 0 : i32
    %0 = arith.cmpi eq, %arg1, %c0_i32 : i32
    %1 = arith.extui %0 : i1 to i32
    %c0_i32_0 = arith.constant 0 : i32
    %2 = arith.cmpi ne, %1, %c0_i32_0 : i32
    scf.if %2 {
      %cst_20 = arith.constant 0.000000e+00 : f32
      %32 = vector.broadcast %cst_20 : f32 to vector<16x32xf32>
      %c0_21 = arith.constant 0 : index
      %c0_22 = arith.constant 0 : index
      %33 = vector.load %arg7[%c0_21, %c0_22] : memref<16x32xf32, #tpu.memory_space<vmem>>, vector<16x32xf32>
      tpu.vector_store %arg7[%c0_21, %c0_22], %32 {strides = array<i32>} : memref<16x32xf32, #tpu.memory_space<vmem>>, vector<16x32xf32>,
    } else {
    }
    %c0 = arith.constant 0 : index
    %c0_1 = arith.constant 0 : index
    %3 = vector.load %arg2[%c0, %c0_1] : memref<16x32xbf16, #tpu.memory_space<vmem>>, vector<16x32xbf16>
    %c0_2 = arith.constant 0 : index
    %c0_3 = arith.constant 0 : index
    %4 = vector.load %arg3[%c0_2, %c0_3] : memref<32x128xbf16, #tpu.memory_space<vmem>>, vector<32x128xbf16>
    %cst = arith.constant dense<0.000000e+00> : vector<16x128xf32>
    %5 = tpu.matmul %3, %4, %cst {dimension_numbers = #tpu.dot_dimension_numbers<[1], [0], [0], [1], [0, 0, 1, 1], [], []>} : vector<16x32xbf16>, vector<32x128xbf16>, vector<16x128xf32> -> vector<16x128xf32>
    %c0_4 = arith.constant 0 : index
    %c0_5 = arith.constant 0 : index
    %6 = vector.load %arg4[%c0_4, %c0_5] : memref<1x128xf32, #tpu.memory_space<vmem>>, vector<1x128xf32>
    %7 = vector.broadcast %6 : vector<1x128xf32> to vector<16x128xf32>
    %8 = arith.addf %5, %7 : vector<16x128xf32>
    %cst_6 = arith.constant 5.000000e-01 : f32
    %9 = vector.broadcast %cst_6 : f32 to vector<16x128xf32>
    %10 = arith.mulf %9, %8 : vector<16x128xf32>
    %cst_7 = arith.constant 0.797884583 : f32
    %11 = vector.broadcast %cst_7 : f32 to vector<16x128xf32>
    %12 = arith.mulf %11, %8 : vector<16x128xf32>
    %cst_8 = arith.constant 4.471500e-02 : f32
    %13 = vector.broadcast %cst_8 : f32 to vector<16x128xf32>
    %14 = arith.mulf %13, %8 : vector<16x128xf32>
    %15 = arith.mulf %14, %8 : vector<16x128xf32>
    %cst_9 = arith.constant 1.000000e+00 : f32
    %16 = vector.broadcast %cst_9 : f32 to vector<16x128xf32>
    %17 = arith.addf %16, %15 : vector<16x128xf32>
    %18 = arith.mulf %12, %17 : vector<16x128xf32>
    %19 = math.tanh %18 : vector<16x128xf32>
    %cst_10 = arith.constant 1.000000e+00 : f32
    %20 = vector.broadcast %cst_10 : f32 to vector<16x128xf32>
    %21 = arith.addf %20, %19 : vector<16x128xf32>
    %22 = arith.mulf %10, %21 : vector<16x128xf32>
    %c0_11 = arith.constant 0 : index
    %c0_12 = arith.constant 0 : index
    %23 = vector.load %arg7[%c0_11, %c0_12] : memref<16x32xf32, #tpu.memory_space<vmem>>, vector<16x32xf32>
    %24 = arith.truncf %22 : vector<16x128xf32> to vector<16x128xbf16>
    %c0_13 = arith.constant 0 : index
    %c0_14 = arith.constant 0 : index
    %25 = vector.load %arg5[%c0_13, %c0_14] : memref<128x32xbf16, #tpu.memory_space<vmem>>, vector<128x32xbf16>
    %cst_15 = arith.constant dense<0.000000e+00> : vector<16x32xf32>
    %26 = tpu.matmul %24, %25, %cst_15 {dimension_numbers = #tpu.dot_dimension_numbers<[1], [0], [0], [1], [0, 0, 1, 1], [], []>} : vector<16x128xbf16>, vector<128x32xbf16>, vector<16x32xf32> -> vector<16x32xf32>
    %27 = arith.addf %23, %26 : vector<16x32xf32>
    %c0_16 = arith.constant 0 : index
    %c0_17 = arith.constant 0 : index
    %28 = vector.load %arg7[%c0_16, %c0_17] : memref<16x32xf32, #tpu.memory_space<vmem>>, vector<16x32xf32>
    tpu.vector_store %arg7[%c0_16, %c0_17], %27 {strides = array<i32>} : memref<16x32xf32, #tpu.memory_space<vmem>>, vector<16x32xf32>,
    %c0_i32_18 = arith.constant 0 : i32
    %29 = arith.cmpi eq, %arg1, %c0_i32_18 : i32
    %30 = arith.extui %29 : i1 to i32
    %c0_i32_19 = arith.constant 0 : i32
    %31 = arith.cmpi ne, %30, %c0_i32_19 : i32
    scf.if %31 {
      %c0_20 = arith.constant 0 : index
      %c0_21 = arith.constant 0 : index
      %32 = vector.load %arg7[%c0_20, %c0_21] : memref<16x32xf32, #tpu.memory_space<vmem>>, vector<16x32xf32>
      %c0_22 = arith.constant 0 : index
      %c0_23 = arith.constant 0 : index
      %33 = vector.load %arg6[%c0_22, %c0_23] : memref<1x32xf32, #tpu.memory_space<vmem>>, vector<1x32xf32>
      %34 = vector.broadcast %33 : vector<1x32xf32> to vector<16x32xf32>
      %35 = arith.addf %32, %34 : vector<16x32xf32>
      %c0_24 = arith.constant 0 : index
      %c0_25 = arith.constant 0 : index
      %36 = vector.load %arg7[%c0_24, %c0_25] : memref<16x32xf32, #tpu.memory_space<vmem>>, vector<16x32xf32>
      tpu.vector_store %arg7[%c0_24, %c0_25], %35 {strides = array<i32>} : memref<16x32xf32, #tpu.memory_space<vmem>>, vector<16x32xf32>,
    } else {
    }
    return
  }
  func.func @transform_0(%arg0: i32, %arg1: i32) -> (i32, i32) {
    %c0_i32 = arith.constant 0 : i32
    %c0_i32_0 = arith.constant 0 : i32
    return %arg0, %c0_i32 : i32, i32
  }
  func.func @transform_1(%arg0: i32, %arg1: i32) -> (i32, i32) {
    %c0_i32 = arith.constant 0 : i32
    %c0_i32_0 = arith.constant 0 : i32
    return %c0_i32, %arg1 : i32, i32
  }
  func.func @transform_2(%arg0: i32, %arg1: i32) -> (i32, i32) {
    %c0_i32 = arith.constant 0 : i32
    %c0_i32_0 = arith.constant 0 : i32
    return %c0_i32, %arg1 : i32, i32
  }
  func.func @transform_3(%arg0: i32, %arg1: i32) -> (i32, i32) {
    %c0_i32 = arith.constant 0 : i32
    %c0_i32_0 = arith.constant 0 : i32
    return %arg1, %c0_i32 : i32, i32
  }
  func.func @transform_4(%arg0: i32, %arg1: i32) -> (i32, i32) {
    %c0_i32 = arith.constant 0 : i32
    %c0_i32_0 = arith.constant 0 : i32
    %c0_i32_1 = arith.constant 0 : i32
    return %c0_i32, %c0_i32_0 : i32, i32
  }
  func.func @transform_5(%arg0: i32, %arg1: i32) -> (i32, i32) {
    %c0_i32 = arith.constant 0 : i32
    %c0_i32_0 = arith.constant 0 : i32
    return %arg0, %c0_i32 : i32, i32
  }
}

</mosaic_0001>

<llo_original>
// kernel: tpu_custom_call.1
$region0: #{tpu_custom_call.1}
  #allocation0 [shape = 'u32[]', space=smem, size = 0x4, offset = 0x4, fixed_abs, tag = 'smem constant byte address 0x4 - core index']
  #allocation1 [shape = 'u32[72,128]{1,0:T(1,128)}', space=vmem, size = 0x9000, scoped, tag = 'internal scratch']
  %s0 = inlined_call_operand.vmem [shape: bf16[16,32], index: 0, kind: input, shape index: {}]
  %s1 = inlined_call_operand.vmem [shape: bf16[32,128], index: 1, kind: input, shape index: {}]
  %s2 = inlined_call_operand.vmem [shape: f32[1,128], index: 2, kind: input, shape index: {}]
  %s3 = inlined_call_operand.vmem [shape: bf16[128,32], index: 3, kind: input, shape index: {}]
  %s4 = inlined_call_operand.vmem [shape: f32[1,32], index: 4, kind: input, shape index: {}]
  %s5 = inlined_call_operand.hbm [shape: f32[16,32], index: 5, kind: output, shape index: {}]
  %s6 = sld [smem:[#allocation0]]
  $region38: #{tpu_custom_call.1} parent=0
    _
  %s8 = ssub.s32 1, %s6
  %s9 = scalar_select 0, %s8, %s6
  $region1: #{tpu_custom_call.1} parent=0
    #allocation2 [shape = 'u8[8192]{0}', space=vmem, size = 0x2000, scoped, tag = 'output window, operand 0, single buffered']
    #allocation3 [shape = 's32[1]{0}', space=sflag, size = 0x4, scoped, tag = 'scoped memory for tpu_custom_call.1']
    %10 = vsyncpa [#allocation3], 0
    // Predicated region
    $region2: #{tpu_custom_call.1} parent=1 // pred_check
      _
    $region3: #{tpu_custom_call.1} parent=1 // pred_check_branch
      %12 = sbr.rel (0) target = $region5
    $region4: #{tpu_custom_call.1} parent=1 // pred_region
      _
    $region5: #{tpu_custom_call.1} parent=1 // pred_fallthru
      _
    // Predicated region
    $region6: #{tpu_custom_call.1} parent=1 // pred_check
      _
    $region7: #{tpu_custom_call.1} parent=1 // pred_check_branch
      %14 = sbr.rel (0) target = $region9
    $region8: #{tpu_custom_call.1} parent=1 // pred_region
      _
    $region9: #{tpu_custom_call.1} parent=1 // pred_fallthru
      _
    // Predicated region
    $region10: #{tpu_custom_call.1} parent=1 // pred_check
      _
    $region11: #{tpu_custom_call.1} parent=1 // pred_check_branch
      %16 = sbr.rel (0) target = $region13
    $region12: #{tpu_custom_call.1} parent=1 // pred_region
      _
    $region13: #{tpu_custom_call.1} parent=1 // pred_fallthru
      _
    // Predicated region
    $region14: #{tpu_custom_call.1} parent=1 // pred_check
      _
    $region15: #{tpu_custom_call.1} parent=1 // pred_check_branch
      %18 = sbr.rel (0) target = $region17
    $region16: #{tpu_custom_call.1} parent=1 // pred_region
      _
    $region17: #{tpu_custom_call.1} parent=1 // pred_fallthru
      _
    // Predicated region
    $region18: #{tpu_custom_call.1} parent=1 // pred_check
      _
    $region19: #{tpu_custom_call.1} parent=1 // pred_check_branch
      %20 = sbr.rel (0) target = $region21
    $region20: #{tpu_custom_call.1} parent=1 // pred_region
      _
    $region21: #{tpu_custom_call.1} parent=1 // pred_fallthru
      _
    %p22 = scmp.eq.s32.totalorder 0, 0
    // Predicated region
    $region22: #{tpu_custom_call.1} parent=1 // pred_check
      %p23 = pneg %p22
    $region23: #{tpu_custom_call.1} parent=1 // pred_check_branch
      %25 = sbr.rel (%p23) target = $region25
    $region24: #{tpu_custom_call.1} parent=1 // pred_region
      %vm26 = vcmask 261120
      %27 = vst.msk [vmem:[#allocation2] sm:$0xff] %vm26, 0.0
      %28 = vst.msk [vmem:[#allocation2 + $0x8] sm:$0xff] %vm26, 0.0
    $region25: #{tpu_custom_call.1} parent=1 // pred_fallthru
      _
    %v29 = vld [vmem:[%s0] sm:$0xf]
    %v30 = vld [vmem:[%s0 + $0x4] sm:$0xf]
    %v31 = vld [vmem:[%s1] sm:$0xf]
    %v32 = vld [vmem:[%s1 + $0x4] sm:$0xf]
    %v33 = vld [vmem:[%s1 + $0x8] sm:$0xf]
    %v34 = vld [vmem:[%s1 + $0xc] sm:$0xf]
    %v35 = vld [vmem:[%s2] sm:$0x1]
    %v37 = vperm.slane %v35, 0
    %v41 = vunpack.c.l.b16 %v29
    %v42 = vunpack.c.l.b16 %v30
    %v43 = vpack.c.b16 %v42, %v41
    %v48 = vunpack.c.l.b16 %v31
    %v49 = vunpack.c.l.b16 %v32
    %v50 = vunpack.c.l.b16 %v33
    %v51 = vunpack.c.l.b16 %v34
    %v52 = vpack.c.b16 %v49, %v48
    %v53 = vpack.c.b16 %v51, %v50
    %vm56 = vcmask 261120
    %v58 = vsel %vm56, %v43, 0
    %60 = vmatpush.bf16.msra.mxu0 0
    %61 = vmatpush.bf16.msra.mxu0 0
    %62 = vmatpush.bf16.msra.mxu0 0
    %63 = vmatpush.bf16.msra.mxu0 0
    %64 = vmatpush.bf16.msra.mxu0 0
    %65 = vmatpush.bf16.msra.mxu0 0
    %66 = vmatpush.bf16.msra.mxu0 %v53
    %67 = vmatpush.bf16.msra.mxu0 %v52
    %68 = vmatmul.bf16.gmra.mxu0 %v58
    %v69 = vpop.f32.mrf.mxu0
    %v70 = vadd.f32 %v37, %v69
    %v71 = vpop.f32.mrf.mxu0
    %v72 = vadd.f32 %v37, %v71
    %73 = vdwg.mxu0
    %v74 = vmul.f32 %v70, 0.5
    %v75 = vmul.f32 %v72, 0.5
    %v76 = vmul.f32 %v70, 0.7978846
    %v77 = vmul.f32 %v72, 0.7978846
    %v78 = vmul.f32 %v70, 0.044715
    %v79 = vmul.f32 %v72, 0.044715
    %v80 = vmul.f32 %v78, %v70
    %v81 = vmul.f32 %v79, %v72
    %v82 = vadd.f32 %v80, 1.0
    %v83 = vadd.f32 %v81, 1.0
    %v84 = vmul.f32 %v76, %v82
    %v85 = vmul.f32 %v77, %v83
    %v86 = vtanh.pop %v84
    %v87 = vtanh.pop %v85
    %v88 = vadd.f32 %v86, 1.0
    %v89 = vadd.f32 %v87, 1.0
    %v90 = vmul.f32 %v74, %v88
    %v91 = vmul.f32 %v75, %v89
    %v92 = vld [vmem:[#allocation2] sm:$0xff]
    %v93 = vld [vmem:[#allocation2 + $0x8] sm:$0xff]
    %v94 = vpack.c.bf16 %v91, %v90
    %v95 = vld [vmem:[%s3] sm:$0xf]
    %v96 = vld [vmem:[%s3 + $0x4] sm:$0xf]
    %v97 = vld [vmem:[%s3 + $0x8] sm:$0xf]
    %v98 = vld [vmem:[%s3 + $0xc] sm:$0xf]
    %v99 = vld [vmem:[%s3 + $0x10] sm:$0xf]
    %v100 = vld [vmem:[%s3 + $0x14] sm:$0xf]
    %v101 = vld [vmem:[%s3 + $0x18] sm:$0xf]
    %v102 = vld [vmem:[%s3 + $0x1c] sm:$0xf]
    %v103 = vld [vmem:[%s3 + $0x20] sm:$0xf]
    %v104 = vld [vmem:[%s3 + $0x24] sm:$0xf]
    %v105 = vld [vmem:[%s3 + $0x28] sm:$0xf]
    %v106 = vld [vmem:[%s3 + $0x2c] sm:$0xf]
    %v107 = vld [vmem:[%s3 + $0x30] sm:$0xf]
    %v108 = vld [vmem:[%s3 + $0x34] sm:$0xf]
    %v109 = vld [vmem:[%s3 + $0x38] sm:$0xf]
    %v110 = vld [vmem:[%s3 + $0x3c] sm:$0xf]
    %v127 = vunpack.c.l.b16 %v95
    %v128 = vunpack.c.l.b16 %v96
    %v129 = vunpack.c.l.b16 %v97
    %v130 = vunpack.c.l.b16 %v98
    %v131 = vunpack.c.l.b16 %v99
    %v132 = vunpack.c.l.b16 %v100
    %v133 = vunpack.c.l.b16 %v101
    %v134 = vunpack.c.l.b16 %v102
    %v135 = vunpack.c.l.b16 %v103
    %v136 = vunpack.c.l.b16 %v104
    %v137 = vunpack.c.l.b16 %v105
    %v138 = vunpack.c.l.b16 %v106
    %v139 = vunpack.c.l.b16 %v107
    %v140 = vunpack.c.l.b16 %v108
    %v141 = vunpack.c.l.b16 %v109
    %v142 = vunpack.c.l.b16 %v110
    %v143 = vpack.c.b16 %v128, %v127
    %v144 = vpack.c.b16 %v130, %v129
    %v145 = vpack.c.b16 %v132, %v131
    %v146 = vpack.c.b16 %v134, %v133
    %v147 = vpack.c.b16 %v136, %v135
    %v148 = vpack.c.b16 %v138, %v137
    %v149 = vpack.c.b16 %v140, %v139
    %v150 = vpack.c.b16 %v142, %v141
    %159 = vmatpush.bf16.msra.mxu0 %v150
    %160 = vmatpush.bf16.msra.mxu0 %v149
    %161 = vmatpush.bf16.msra.mxu0 %v148
    %162 = vmatpush.bf16.msra.mxu0 %v147
    %163 = vmatpush.bf16.msra.mxu0 %v146
    %164 = vmatpush.bf16.msra.mxu0 %v145
    %165 = vmatpush.bf16.msra.mxu0 %v144
    %166 = vmatpush.bf16.msra.mxu0 %v143
    %167 = vmatmul.bf16.gmra.mxu0 %v94
    %v168 = vpop.f32.mrf.mxu0
    %v169 = vadd.f32 0.0, %v168
    %v170 = vpop.f32.mrf.mxu0
    %v171 = vadd.f32 0.0, %v170
    %172 = vdwg.mxu0
    %v173 = vadd.f32 %v92, %v169
    %v174 = vadd.f32 %v93, %v171
    %175 = vst.msk [vmem:[#allocation2] sm:$0xff] %vm56, %v173
    %176 = vst.msk [vmem:[#allocation2 + $0x8] sm:$0xff] %vm56, %v174
    // Predicated region
    $region26: #{tpu_custom_call.1} parent=1 // pred_check
      %p177 = pneg %p22
    $region27: #{tpu_custom_call.1} parent=1 // pred_check_branch
      %179 = sbr.rel (%p177) target = $region29
    $region28: #{tpu_custom_call.1} parent=1 // pred_region
      %v180 = vld [vmem:[#allocation2] sm:$0xff]
      %v181 = vld [vmem:[#allocation2 + $0x8] sm:$0xff]
      %v182 = vld [vmem:[%s4] sm:$0x1]
      %v184 = vperm.slane %v182, 0
      %v186 = vadd.f32 %v180, %v184
      %v187 = vadd.f32 %v181, %v184
      %188 = vst.msk [vmem:[#allocation2] sm:$0xff] %vm56, %v186
      %189 = vst.msk [vmem:[#allocation2 + $0x8] sm:$0xff] %vm56, %v187
    $region29: #{tpu_custom_call.1} parent=1 // pred_fallthru
      _
    // Predicated region
    $region30: #{tpu_custom_call.1} parent=1 // pred_check
      _
    $region31: #{tpu_custom_call.1} parent=1 // pred_check_branch
      %191 = sbr.rel (0) target = $region33
    $region32: #{tpu_custom_call.1} parent=1 // pred_region
      %193 = vsyncadd [#allocation3], 0
      %s194 = sshll.u32 [#allocation2], 4
      %s195 = int_to_ptr.vmem [resolvable:$true] %s194
      %s196 = sshll.u32 %s5, 4
      %s197 = int_to_ptr.hbm [resolvable:$true] %s196
      %202 = dma.vmem_to_hbm [thread:$0]  %s195, 256, %s197, [#allocation3], 128, 128, 8
    $region33: #{tpu_custom_call.1} parent=1 // pred_fallthru
      _
    // Predicated region
    $region34: #{tpu_custom_call.1} parent=1 // pred_check
      _
    $region35: #{tpu_custom_call.1} parent=1 // pred_check_branch
      %204 = sbr.rel (0) target = $region37
    $region36: #{tpu_custom_call.1} parent=1 // pred_region
      %206 = dma.done [#allocation3], 256
    $region37: #{tpu_custom_call.1} parent=1 // pred_fallthru
      _
    %207 = vsyncpa [#allocation3], 1

</llo_original>
